<compile_context>
chip_gen: v7x
topology: tpu7x:2x2x1
jax: 0.10.0
libtpu: 0.0.40
codegen_flags: <defaults>
</compile_context>

<pallas_src>
import jax
import jax.numpy as jnp
from jax.experimental import pallas as pl
from jax.experimental.pallas import tpu as pltpu

F_IN = 80
F_OUT = 40
# 8192 rows * 80 feat * 4 B = 2.62 MiB per input block (+1.31 MiB output block);
# x2 pipeline buffers ~= 7.9 MiB -> comfortably under the 16 MiB scoped-VMEM
# default on v5e and well on the flat part of the HBM-roofline curve everywhere.
MAX_TILE_B = 8192


def weighted_sum_kernel(w_ref, x_ref, o_ref):
    # w_ref: (2,) scalars in SMEM.  x_ref: (tile_b, 80) block in VMEM.
    w0 = w_ref[0]
    w1 = w_ref[1]
    eam = x_ref[:, :F_OUT]
    cam = x_ref[:, F_OUT:]
    o_ref[...] = w0 * eam + w1 * cam


def weighted_sum(x, weights):
    """x: (B, 80) float32, weights: (1, 2) float32 -> (B, 40) float32."""
    B, F = x.shape
    assert F == F_IN, "module expects 80 features (split into 2 x 40)"
    w = weights.reshape(2)  # 1-D SMEM ref: no (8,128) padding, no row index

    # Full-dim block when B is small (always legal); otherwise a multiple-of-8
    # row tile with pl.cdiv for the grid (tail blocks are masked by Pallas).
    tile_b = B if B <= MAX_TILE_B else MAX_TILE_B
    grid = (pl.cdiv(B, tile_b),)

    return pl.pallas_call(
        weighted_sum_kernel,
        out_shape=jax.ShapeDtypeStruct((B, F_OUT), x.dtype),
        grid=grid,
        in_specs=[
            pl.BlockSpec(memory_space=pltpu.SMEM),            # weights (2,) scalars
            pl.BlockSpec((tile_b, F_IN), lambda i: (i, 0)),   # batch-tiled x
        ],
        out_specs=pl.BlockSpec((tile_b, F_OUT), lambda i: (i, 0)),
        compiler_params=pltpu.CompilerParams(
            # Batch tiles are independent: shard across the 2 TCs on v7x.
            dimension_semantics=("parallel",),
        ),
    )(w, x)


def _ref(x, weights):
    return weights[0, 0] * x[:, :F_OUT] + weights[0, 1] * x[:, F_OUT:]


if __name__ == "__main__":
    key = jax.random.PRNGKey(0)
    weights = jnp.array([[0.3, 0.7]], dtype=jnp.float32)

    # Small shape matching the module's expected (batch, 80) input.
    B1 = 8
    x1 = jax.random.normal(key, (B1, F_IN), dtype=jnp.float32)
    out1 = jax.block_until_ready(weighted_sum(x1, weights))
    assert out1.shape == (B1, F_OUT)
    assert jnp.allclose(out1, _ref(x1, weights), atol=1e-6, rtol=1e-6)

    # Larger batch to exercise the gridded / pipelined path (2 tiles of 8192).
    B2 = 2 * MAX_TILE_B
    x2 = jax.random.normal(jax.random.PRNGKey(1), (B2, F_IN), dtype=jnp.float32)
    out2 = jax.block_until_ready(weighted_sum(x2, weights))
    assert out2.shape == (B2, F_OUT)
    assert jnp.allclose(out2, _ref(x2, weights), atol=1e-6, rtol=1e-6)

    print("KERNEL_OK")
</pallas_src>

<mosaic_0001>
module attributes {stable_mosaic.version = 11 : i64} {
  func.func @weighted_sum_kernel(%arg0: i32, %arg1: memref<2xf32, #tpu.memory_space<smem>>, %arg2: memref<8x80xf32, #tpu.memory_space<vmem>>, %arg3: memref<8x40xf32, #tpu.memory_space<vmem>>) attributes {dimension_semantics = [#tpu.dimension_semantics<parallel>], iteration_bounds = array<i64: 1>, scalar_prefetch = 0 : i64, scratch_operands = 0 : i64, tpu.core_type = #tpu.core_type<tc>, window_params = [{transform_indices = @transform_0, window_bounds = array<i64: 2>}, {transform_indices = @transform_1, window_bounds = array<i64: 8, 80>}, {transform_indices = @transform_2, window_bounds = array<i64: 8, 40>}]} {
    %c0 = arith.constant 0 : index
    %0 = memref.load %arg1[%c0] : memref<2xf32, #tpu.memory_space<smem>>
    %c1 = arith.constant 1 : index
    %1 = memref.load %arg1[%c1] : memref<2xf32, #tpu.memory_space<smem>>
    %c0_0 = arith.constant 0 : index
    %c0_1 = arith.constant 0 : index
    %2 = vector.load %arg2[%c0_0, %c0_1] : memref<8x80xf32, #tpu.memory_space<vmem>>, vector<8x40xf32>
    %c0_2 = arith.constant 0 : index
    %c40 = arith.constant 40 : index
    %3 = vector.load %arg2[%c0_2, %c40] : memref<8x80xf32, #tpu.memory_space<vmem>>, vector<8x40xf32>
    %4 = vector.broadcast %0 : f32 to vector<8x40xf32>
    %5 = arith.mulf %4, %2 : vector<8x40xf32>
    %6 = vector.broadcast %1 : f32 to vector<8x40xf32>
    %7 = arith.mulf %6, %3 : vector<8x40xf32>
    %8 = arith.addf %5, %7 : vector<8x40xf32>
    %c0_3 = arith.constant 0 : index
    %c0_4 = arith.constant 0 : index
    %9 = vector.load %arg3[%c0_3, %c0_4] : memref<8x40xf32, #tpu.memory_space<vmem>>, vector<8x40xf32>
    tpu.vector_store %arg3[%c0_3, %c0_4], %8 {strides = array<i32>} : memref<8x40xf32, #tpu.memory_space<vmem>>, vector<8x40xf32>,
    return
  }
  func.func @transform_0(%arg0: i32) -> i32 {
    %c0_i32 = arith.constant 0 : i32
    %c0_i32_0 = arith.constant 0 : i32
    return %c0_i32 : i32
  }
  func.func @transform_1(%arg0: i32) -> (i32, i32) {
    %c0_i32 = arith.constant 0 : i32
    %c0_i32_0 = arith.constant 0 : i32
    return %arg0, %c0_i32 : i32, i32
  }
  func.func @transform_2(%arg0: i32) -> (i32, i32) {
    %c0_i32 = arith.constant 0 : i32
    %c0_i32_0 = arith.constant 0 : i32
    return %arg0, %c0_i32 : i32, i32
  }
}

</mosaic_0001>

<llo_original>
// kernel: tpu_custom_call.1
$region0: #{tpu_custom_call.1}
  #allocation0 [shape = 'u32[]', space=smem, size = 0x4, offset = 0x4, fixed_abs, tag = 'smem constant byte address 0x4 - core index']
  #allocation1 [shape = 'u32[144,128]{1,0:T(1,128)}', space=vmem, size = 0x12000, scoped, tag = 'internal scratch']
  %s0 = inlined_call_operand.hbm [shape: f32[2], index: 0, kind: input, shape index: {}]
  %s1 = inlined_call_operand.hbm [shape: f32[8,80], index: 1, kind: input, shape index: {}]
  %s2 = inlined_call_operand.hbm [shape: f32[8,40], index: 2, kind: output, shape index: {}]
  %s3 = sld [smem:[#allocation0]]
  $region26: #{tpu_custom_call.1} parent=0
    _
  %s5 = ssub.s32 1, %s3
  %s6 = scalar_select 0, %s5, %s3
  $region1: #{tpu_custom_call.1} parent=0
    #allocation2 [shape = 'u8[512]{0}', space=smem, size = 0x200, scoped, tag = 'input window, operand 0, single buffered']
    #allocation3 [shape = 's32[1]{0}', space=sflag, size = 0x4, scoped, tag = 'scoped memory for tpu_custom_call.1']
    #allocation4 [shape = 's32[1]{0}', space=sflag, size = 0x4, scoped, tag = 'scoped memory for tpu_custom_call.1']
    #allocation5 [shape = 's32[1]{0}', space=sflag, size = 0x4, scoped, tag = 'scoped memory for tpu_custom_call.1']
    #allocation6 [shape = 'u8[4096]{0}', space=vmem, size = 0x1000, scoped, tag = 'input window, operand 1, single buffered']
    #allocation7 [shape = 'u8[4096]{0}', space=vmem, size = 0x1000, scoped, tag = 'output window, operand 0, single buffered']
    %7 = vsyncpa [#allocation5], 0
    %8 = vsyncpa [#allocation3], 0
    %9 = vsyncpa [#allocation4], 0
    // Predicated region
    $region2: #{tpu_custom_call.1} parent=1 // pred_check
      _
    $region3: #{tpu_custom_call.1} parent=1 // pred_check_branch
      %11 = sbr.rel (0) target = $region5
    $region4: #{tpu_custom_call.1} parent=1 // pred_region
      %s13 = ssub.s32 16, 16
      %14 = vsyncadd [#allocation5], %s13
      %17 = dma.hbm_to_smem %s0, 16, [#allocation2], [#allocation5]
    $region5: #{tpu_custom_call.1} parent=1 // pred_fallthru
      _
    // Predicated region
    $region6: #{tpu_custom_call.1} parent=1 // pred_check
      _
    $region7: #{tpu_custom_call.1} parent=1 // pred_check_branch
      %19 = sbr.rel (0) target = $region9
    $region8: #{tpu_custom_call.1} parent=1 // pred_region
      %s21 = ssub.s32 128, 128
      %22 = vsyncadd [#allocation3], %s21
      %s24 = sshll.u32 [#allocation6], 4
      %s25 = int_to_ptr.vmem [resolvable:$true] %s24
      %27 = dma.hbm_to_vmem [thread:$0]  %s1, 128, %s25, [#allocation3]
    $region9: #{tpu_custom_call.1} parent=1 // pred_fallthru
      _
    // Predicated region
    $region10: #{tpu_custom_call.1} parent=1 // pred_check
      _
    $region11: #{tpu_custom_call.1} parent=1 // pred_check_branch
      %29 = sbr.rel (0) target = $region13
    $region12: #{tpu_custom_call.1} parent=1 // pred_region
      %30 = dma.done [#allocation5], 16
    $region13: #{tpu_custom_call.1} parent=1 // pred_fallthru
      _
    // Predicated region
    $region14: #{tpu_custom_call.1} parent=1 // pred_check
      _
    $region15: #{tpu_custom_call.1} parent=1 // pred_check_branch
      %32 = sbr.rel (0) target = $region17
    $region16: #{tpu_custom_call.1} parent=1 // pred_region
      %33 = dma.done [#allocation3], 128
    $region17: #{tpu_custom_call.1} parent=1 // pred_fallthru
      _
    %34 = sfence
    %s35 = sld [smem:[#allocation2]]
    %s36 = sld [smem:[#allocation2 + $0x1]]
    %v37 = vld [vmem:[#allocation6] sm:$0xff]
    %v38 = vstv %s35
    %v39 = vmul.f32 %v38, %v37
    %v40 = vstv %s36
    %v41 = vmul.f32 %v40, %v37
    %43 = vrot.lane.b32.xlu0 %v41, 88
    %v44 = vpop.permute.xlu0 %43
    %v46 = vadd.f32 %v39, %v44
    %vm47 = vcmask 326656
    %48 = vst.msk [vmem:[#allocation7] sm:$0xff] %vm47, %v46
    // Predicated region
    $region18: #{tpu_custom_call.1} parent=1 // pred_check
      _
    $region19: #{tpu_custom_call.1} parent=1 // pred_check_branch
      %50 = sbr.rel (0) target = $region21
    $region20: #{tpu_custom_call.1} parent=1 // pred_region
      %s52 = ssub.s32 128, 128
      %53 = vsyncadd [#allocation4], %s52
      %s55 = sshll.u32 [#allocation7], 4
      %s56 = int_to_ptr.vmem [resolvable:$true] %s55
      %58 = dma.vmem_to_hbm [thread:$0]  %s56, 128, %s2, [#allocation4]
    $region21: #{tpu_custom_call.1} parent=1 // pred_fallthru
      _
    // Predicated region
    $region22: #{tpu_custom_call.1} parent=1 // pred_check
      _
    $region23: #{tpu_custom_call.1} parent=1 // pred_check_branch
      %60 = sbr.rel (0) target = $region25
    $region24: #{tpu_custom_call.1} parent=1 // pred_region
      %61 = dma.done [#allocation4], 128
    $region25: #{tpu_custom_call.1} parent=1 // pred_fallthru
      _
    %62 = vsyncpa [#allocation3], 1
    %63 = vsyncpa [#allocation4], 1
    %64 = vsyncpa [#allocation5], 1

</llo_original>
